<compile_context>
chip_gen: v7x
topology: tpu7x:2x2x1
jax: 0.10.0
libtpu: 0.0.40
codegen_flags: <defaults>
</compile_context>

<pallas_src>
import functools

import jax
import jax.numpy as jnp
from jax.experimental import pallas as pl
from jax.experimental.pallas import tpu as pltpu

_MAX_ROWS_PER_TILE = 8192          # upper bound on rows per grid step
_INPUT_VMEM_BUDGET = 16 * 1024 * 1024   # both inputs, double-buffered
_VMEM_LIMIT_BYTES = 40 * 1024 * 1024    # > v5e/v6e defaults, < v7x physical


def _round_up(x, m):
    return (x + m - 1) // m * m


def _round_down(x, m):
    return x // m * m


def _sublane_mult(dtype):
    # rows-per-tile granularity so partial tiles stay layout-legal:
    # f32 -> 8, bf16 -> 16, int8/fp8 -> 32
    return max(8, 32 // jnp.dtype(dtype).itemsize)


def _uniqueness_kernel(net_ref, ind_ref, o_ref, acc_ref, *,
                       batch, tiles_per_split, eps):
    p = pl.program_id(0)       # parallel split
    i = pl.program_id(1)       # reduction step within split

    @pl.when(i == 0)
    def _():
        acc_ref[...] = jnp.zeros_like(acc_ref)

    x = net_ref[...].astype(jnp.float32)   # (TB, C) cast in-kernel (VPU filler)
    t = ind_ref[...].astype(jnp.float32)   # (TB, C)
    tb = x.shape[0]

    # Logical (unclamped) tile index -> global row ids; rows past the true
    # batch (ragged last tile, padded block, or clamped over-run tile) are
    # discarded by the single per-row select below.
    tile = p * tiles_per_split + i
    row_ids = tile * tb + jax.lax.broadcasted_iota(jnp.int32, (tb, 1), 0)
    valid = row_ids < batch                # (TB, 1) bool

    # logits: tanh(net - row_mean) + eps   (eps kept for fidelity with the spec)
    m = jnp.mean(x, axis=1, keepdims=True)                 # (TB, 1)
    s = jnp.tanh(x - m) + eps                              # (TB, C)

    # logits are bounded in (-1+eps, 1+eps]: plain logsumexp is safe, no
    # max-subtraction needed (saves one cross-lane max + one full-tile sub).
    lse = jnp.log(jnp.sum(jnp.exp(s), axis=1, keepdims=True))   # (TB, 1)

    # Fused soft-target cross entropy: single cross-lane reduce.
    per_row = jnp.sum(t * (lse - s), axis=1, keepdims=True)     # (TB, 1)
    acc_ref[...] += jnp.where(valid, per_row, 0.0)

    @pl.when(i == pl.num_programs(1) - 1)
    def _():
        partial = jnp.sum(acc_ref[...])
        r = jax.lax.broadcasted_iota(jnp.int32, (8, 128), 0)
        c = jax.lax.broadcasted_iota(jnp.int32, (8, 128), 1)
        o_ref[...] = jnp.where((r == 0) & (c == 0), partial, 0.0)


def uniqueness_loss(net, indicator_vectors, eps=1e-5, max_rows_per_tile=None):
    """JAX/Pallas equivalent of UniquenessLoss.forward(net, indicator_vectors)."""
    assert net.ndim == 2 and net.shape == indicator_vectors.shape
    batch, num_concepts = net.shape

    sz_net = jnp.dtype(net.dtype).itemsize
    sz_ind = jnp.dtype(indicator_vectors.dtype).itemsize
    g = max(_sublane_mult(net.dtype), _sublane_mult(indicator_vectors.dtype))

    # VMEM-aware batch-row tile: both inputs, double-buffered, fit the budget.
    per_row_bytes = num_concepts * (sz_net + sz_ind) * 2   # x2 pipeline buffers
    tb_cap = max(g, _round_down(_INPUT_VMEM_BUDGET // per_row_bytes, g))
    tb = min(_round_up(batch, g), tb_cap, _MAX_ROWS_PER_TILE)
    if max_rows_per_tile is not None:                       # testing / override
        tb = min(tb, _round_up(max_rows_per_tile, g))

    ntiles = pl.cdiv(batch, tb)
    n_split = 2 if ntiles >= 2 else 1                      # engage both v7x TCs
    tiles_per_split = pl.cdiv(ntiles, n_split)
    grid = (n_split, tiles_per_split)

    def in_map(p, i):
        # clamp over-run logical tiles (their rows are masked in-kernel)
        return (jnp.minimum(p * tiles_per_split + i, ntiles - 1), 0)

    out = pl.pallas_call(
        functools.partial(_uniqueness_kernel, batch=batch,
                          tiles_per_split=tiles_per_split, eps=float(eps)),
        out_shape=jax.ShapeDtypeStruct((n_split * 8, 128), jnp.float32),
        grid_spec=pltpu.PrefetchScalarGridSpec(
            num_scalar_prefetch=0,
            grid=grid,
            in_specs=[
                pl.BlockSpec((tb, num_concepts), in_map),
                pl.BlockSpec((tb, num_concepts), in_map),
            ],
            out_specs=pl.BlockSpec((8, 128), lambda p, i: (p, 0)),
            scratch_shapes=[pltpu.VMEM((tb, 1), jnp.float32)],
        ),
        compiler_params=pltpu.CompilerParams(
            dimension_semantics=("parallel", "arbitrary"),
            vmem_limit_bytes=_VMEM_LIMIT_BYTES,
        ),
        cost_estimate=pl.CostEstimate(
            flops=8 * batch * num_concepts,
            transcendentals=2 * batch * num_concepts + 2 * batch,  # tanh, exp, log
            bytes_accessed=batch * num_concepts * (sz_net + sz_ind)
                           + n_split * 8 * 128 * 4,
        ),
    )(net, indicator_vectors)

    # Each split wrote its partial only at [p*8, 0]; the rest is zeros.
    return jnp.sum(out) / batch


def uniqueness_loss_ref(net, indicator_vectors, eps=1e-5):
    """Pure-JAX reference matching the PyTorch forward."""
    x = net.astype(jnp.float32)
    t = indicator_vectors.astype(jnp.float32)
    s = jnp.tanh(x - jnp.mean(x, axis=1, keepdims=True)) + eps
    logp = jax.nn.log_softmax(s, axis=1)
    return jnp.mean(-jnp.sum(t * logp, axis=1))


if __name__ == "__main__":
    key = jax.random.PRNGKey(0)
    k1, k2, k3, k4 = jax.random.split(key, 4)

    # --- Test 1: small one-hot case (matches the module's typical usage) ---
    batch, num_concepts = 8, 32
    net = jax.random.normal(k1, (batch, num_concepts), jnp.float32)
    labels = jax.random.randint(k2, (batch,), 0, num_concepts)
    indicator_vectors = jax.nn.one_hot(labels, num_concepts, dtype=jnp.float32)

    loss = jax.block_until_ready(uniqueness_loss(net, indicator_vectors))
    ref = uniqueness_loss_ref(net, indicator_vectors)
    assert jnp.allclose(loss, ref, rtol=1e-4, atol=1e-4), (loss, ref)

    # --- Test 2: ragged batch + multi-tile + 2-way parallel split + soft targets ---
    batch2, num_concepts2 = 300, 48
    net2 = jax.random.normal(k3, (batch2, num_concepts2), jnp.float32)
    soft = jax.nn.softmax(jax.random.normal(k4, (batch2, num_concepts2),
                                            jnp.float32), axis=1)
    loss2 = jax.block_until_ready(
        uniqueness_loss(net2, soft, max_rows_per_tile=64))
    ref2 = uniqueness_loss_ref(net2, soft)
    assert jnp.allclose(loss2, ref2, rtol=1e-4, atol=1e-4), (loss2, ref2)

    print("KERNEL_OK")
</pallas_src>

<mosaic_0001>
module attributes {stable_mosaic.version = 11 : i64} {
  func.func @_uniqueness_kernel(%arg0: i32, %arg1: i32, %arg2: memref<8x32xf32, #tpu.memory_space<vmem>>, %arg3: memref<8x32xf32, #tpu.memory_space<vmem>>, %arg4: memref<8x128xf32, #tpu.memory_space<vmem>>, %arg5: memref<8x1xf32, #tpu.memory_space<vmem>>) attributes {dimension_semantics = [#tpu.dimension_semantics<parallel>, #tpu.dimension_semantics<arbitrary>], iteration_bounds = array<i64: 1, 1>, scalar_prefetch = 0 : i64, scratch_operands = 1 : i64, tpu.core_type = #tpu.core_type<tc>, window_params = [{transform_indices = @transform_0, window_bounds = array<i64: 8, 32>}, {transform_indices = @transform_1, window_bounds = array<i64: 8, 32>}, {transform_indices = @transform_2, window_bounds = array<i64: 8, 128>}]} {
    %c0_i32 = arith.constant 0 : i32
    %0 = arith.cmpi eq, %arg1, %c0_i32 : i32
    %1 = arith.extui %0 : i1 to i32
    %c0_i32_0 = arith.constant 0 : i32
    %2 = arith.cmpi ne, %1, %c0_i32_0 : i32
    scf.if %2 {
      %cst_16 = arith.constant 0.000000e+00 : f32
      %39 = vector.broadcast %cst_16 : f32 to vector<8x1xf32>
      %c0_17 = arith.constant 0 : index
      %c0_18 = arith.constant 0 : index
      %40 = vector.load %arg5[%c0_17, %c0_18] : memref<8x1xf32, #tpu.memory_space<vmem>>, vector<8x1xf32>
      tpu.vector_store %arg5[%c0_17, %c0_18], %39 {strides = array<i32>} : memref<8x1xf32, #tpu.memory_space<vmem>>, vector<8x1xf32>,
    } else {
    }
    %c0 = arith.constant 0 : index
    %c0_1 = arith.constant 0 : index
    %3 = vector.load %arg2[%c0, %c0_1] : memref<8x32xf32, #tpu.memory_space<vmem>>, vector<8x32xf32>
    %c0_2 = arith.constant 0 : index
    %c0_3 = arith.constant 0 : index
    %4 = vector.load %arg3[%c0_2, %c0_3] : memref<8x32xf32, #tpu.memory_space<vmem>>, vector<8x32xf32>
    %c1_i32 = arith.constant 1 : i32
    %5 = arith.muli %arg0, %c1_i32 : i32
    %6 = arith.addi %5, %arg1 : i32
    %c8_i32 = arith.constant 8 : i32
    %7 = arith.muli %6, %c8_i32 : i32
    %8 = tpu.iota {dimensions = array<i32: 0>} : vector<8x1xi32>
    %9 = vector.broadcast %7 : i32 to vector<8x1xi32>
    %10 = arith.addi %9, %8 : vector<8x1xi32>
    %c8_i32_4 = arith.constant 8 : i32
    %11 = vector.broadcast %c8_i32_4 : i32 to vector<8x1xi32>
    %12 = arith.cmpi slt, %10, %11 : vector<8x1xi32>
    %cst = arith.constant dense<0.000000e+00> : vector<8xf32>
    %13 = vector.multi_reduction <add>, %3, %cst [1] : vector<8x32xf32> to vector<8xf32>
    %14 = vector.shape_cast %13 : vector<8xf32> to vector<8x1xf32>
    %cst_5 = arith.constant 3.200000e+01 : f32
    %15 = vector.broadcast %cst_5 : f32 to vector<8x1xf32>
    %16 = arith.divf %14, %15 : vector<8x1xf32>
    %17 = vector.broadcast %16 : vector<8x1xf32> to vector<8x32xf32>
    %18 = arith.subf %3, %17 : vector<8x32xf32>
    %19 = math.tanh %18 : vector<8x32xf32>
    %cst_6 = arith.constant 9.99999974E-6 : f32
    %20 = vector.broadcast %cst_6 : f32 to vector<8x32xf32>
    %21 = arith.addf %19, %20 : vector<8x32xf32>
    %22 = math.exp %21 : vector<8x32xf32>
    %cst_7 = arith.constant dense<0.000000e+00> : vector<8xf32>
    %23 = vector.multi_reduction <add>, %22, %cst_7 [1] : vector<8x32xf32> to vector<8xf32>
    %24 = vector.shape_cast %23 : vector<8xf32> to vector<8x1xf32>
    %25 = math.log %24 : vector<8x1xf32>
    %26 = vector.broadcast %25 : vector<8x1xf32> to vector<8x32xf32>
    %27 = arith.subf %26, %21 : vector<8x32xf32>
    %28 = arith.mulf %4, %27 : vector<8x32xf32>
    %cst_8 = arith.constant dense<0.000000e+00> : vector<8xf32>
    %29 = vector.multi_reduction <add>, %28, %cst_8 [1] : vector<8x32xf32> to vector<8xf32>
    %30 = vector.shape_cast %29 : vector<8xf32> to vector<8x1xf32>
    %c0_9 = arith.constant 0 : index
    %c0_10 = arith.constant 0 : index
    %31 = vector.load %arg5[%c0_9, %c0_10] : memref<8x1xf32, #tpu.memory_space<vmem>>, vector<8x1xf32>
    %cst_11 = arith.constant 0.000000e+00 : f32
    %32 = vector.broadcast %cst_11 : f32 to vector<8x1xf32>
    %33 = arith.select %12, %30, %32 : vector<8x1xi1>, vector<8x1xf32>
    %34 = arith.addf %31, %33 : vector<8x1xf32>
    %c0_12 = arith.constant 0 : index
    %c0_13 = arith.constant 0 : index
    %35 = vector.load %arg5[%c0_12, %c0_13] : memref<8x1xf32, #tpu.memory_space<vmem>>, vector<8x1xf32>
    tpu.vector_store %arg5[%c0_12, %c0_13], %34 {strides = array<i32>} : memref<8x1xf32, #tpu.memory_space<vmem>>, vector<8x1xf32>,
    %c0_i32_14 = arith.constant 0 : i32
    %36 = arith.cmpi eq, %arg1, %c0_i32_14 : i32
    %37 = arith.extui %36 : i1 to i32
    %c0_i32_15 = arith.constant 0 : i32
    %38 = arith.cmpi ne, %37, %c0_i32_15 : i32
    scf.if %38 {
      %c0_16 = arith.constant 0 : index
      %c0_17 = arith.constant 0 : index
      %39 = vector.load %arg5[%c0_16, %c0_17] : memref<8x1xf32, #tpu.memory_space<vmem>>, vector<8x1xf32>
      %40 = vector.shape_cast %39 : vector<8x1xf32> to vector<1x8x1xf32>
      %cst_18 = arith.constant dense<0.000000e+00> : vector<1xf32>
      %41 = vector.multi_reduction <add>, %40, %cst_18 [1, 2] : vector<1x8x1xf32> to vector<1xf32>
      %42 = vector.shape_cast %41 : vector<1xf32> to vector<1x1x1xf32>
      %43 = vector.extract %42[0, 0, 0] : f32 from vector<1x1x1xf32>
      %44 = tpu.iota {dimensions = array<i32: 0>} : vector<8x128xi32>
      %45 = tpu.iota {dimensions = array<i32: 1>} : vector<8x128xi32>
      %c0_i32_19 = arith.constant 0 : i32
      %46 = vector.broadcast %c0_i32_19 : i32 to vector<8x128xi32>
      %47 = arith.cmpi eq, %44, %46 : vector<8x128xi32>
      %c0_i32_20 = arith.constant 0 : i32
      %48 = vector.broadcast %c0_i32_20 : i32 to vector<8x128xi32>
      %49 = arith.cmpi eq, %45, %48 : vector<8x128xi32>
      %50 = arith.andi %47, %49 : vector<8x128xi1>
      %cst_21 = arith.constant 0.000000e+00 : f32
      %51 = vector.broadcast %43 : f32 to vector<8x128xf32>
      %52 = vector.broadcast %cst_21 : f32 to vector<8x128xf32>
      %53 = arith.select %50, %51, %52 : vector<8x128xi1>, vector<8x128xf32>
      %c0_22 = arith.constant 0 : index
      %c0_23 = arith.constant 0 : index
      %54 = vector.load %arg4[%c0_22, %c0_23] : memref<8x128xf32, #tpu.memory_space<vmem>>, vector<8x128xf32>
      tpu.vector_store %arg4[%c0_22, %c0_23], %53 {strides = array<i32>} : memref<8x128xf32, #tpu.memory_space<vmem>>, vector<8x128xf32>,
    } else {
    }
    return
  }
  func.func @transform_0(%arg0: i32, %arg1: i32) -> (i32, i32) {
    %c1_i32 = arith.constant 1 : i32
    %0 = arith.muli %arg0, %c1_i32 : i32
    %1 = arith.addi %0, %arg1 : i32
    %c0_i32 = arith.constant 0 : i32
    %2 = arith.minsi %1, %c0_i32 : i32
    %c0_i32_0 = arith.constant 0 : i32
    %c0_i32_1 = arith.constant 0 : i32
    return %2, %c0_i32_0 : i32, i32
  }
  func.func @transform_1(%arg0: i32, %arg1: i32) -> (i32, i32) {
    %c1_i32 = arith.constant 1 : i32
    %0 = arith.muli %arg0, %c1_i32 : i32
    %1 = arith.addi %0, %arg1 : i32
    %c0_i32 = arith.constant 0 : i32
    %2 = arith.minsi %1, %c0_i32 : i32
    %c0_i32_0 = arith.constant 0 : i32
    %c0_i32_1 = arith.constant 0 : i32
    return %2, %c0_i32_0 : i32, i32
  }
  func.func @transform_2(%arg0: i32, %arg1: i32) -> (i32, i32) {
    %c0_i32 = arith.constant 0 : i32
    %c0_i32_0 = arith.constant 0 : i32
    return %arg0, %c0_i32 : i32, i32
  }
}

</mosaic_0001>

<llo_original>
// kernel: tpu_custom_call.1
$region0: #{tpu_custom_call.1}
  #allocation0 [shape = 'u32[]', space=smem, size = 0x4, offset = 0x4, fixed_abs, tag = 'smem constant byte address 0x4 - core index']
  #allocation1 [shape = 'u32[144,128]{1,0:T(1,128)}', space=vmem, size = 0x12000, scoped, tag = 'internal scratch']
  #allocation2 [shape = 'f32[8,1]{1,0:T(8,128)}', space=vmem, size = 0x1000, scoped, tag = 'scratch operand']
  %s0 = inlined_call_operand.hbm [shape: f32[8,32], index: 0, kind: input, shape index: {}]
  %s1 = inlined_call_operand.hbm [shape: f32[8,32], index: 1, kind: input, shape index: {}]
  %s2 = inlined_call_operand.hbm [shape: f32[8,128], index: 2, kind: output, shape index: {}]
  %s3 = sld [smem:[#allocation0]]
  $region34: #{tpu_custom_call.1} parent=0
    _
  %s5 = ssub.s32 1, %s3
  %s6 = scalar_select 0, %s5, %s3
  $region1: #{tpu_custom_call.1} parent=0
    #allocation3 [shape = 'u8[4096]{0}', space=vmem, size = 0x1000, scoped, tag = 'input window, operand 0, single buffered']
    #allocation4 [shape = 's32[1]{0}', space=sflag, size = 0x4, scoped, tag = 'scoped memory for tpu_custom_call.1']
    #allocation5 [shape = 's32[1]{0}', space=sflag, size = 0x4, scoped, tag = 'scoped memory for tpu_custom_call.1']
    #allocation6 [shape = 'u8[4096]{0}', space=vmem, size = 0x1000, scoped, tag = 'input window, operand 1, single buffered']
    #allocation7 [shape = 's32[1]{0}', space=sflag, size = 0x4, scoped, tag = 'scoped memory for tpu_custom_call.1']
    #allocation8 [shape = 'u8[4096]{0}', space=vmem, size = 0x1000, scoped, tag = 'output window, operand 0, single buffered']
    %7 = vsyncpa [#allocation4], 0
    %8 = vsyncpa [#allocation7], 0
    %9 = vsyncpa [#allocation5], 0
    // Predicated region
    $region2: #{tpu_custom_call.1} parent=1 // pred_check
      _
    $region3: #{tpu_custom_call.1} parent=1 // pred_check_branch
      %11 = sbr.rel (0) target = $region5
    $region4: #{tpu_custom_call.1} parent=1 // pred_region
      %s12 = sadd.s32 0, 0
      %p13 = scmp.lt.s32.totalorder %s12, 0
      %s14 = scalar_select %p13, %s12, 0
      %s16 = ssub.s32 128, 128
      %17 = vsyncadd [#allocation4], %s16
      %s18 = smul.addr %s14, 128
      %s19 = scalar_lea.hbm %s0, %s18
      %s21 = sshll.u32 [#allocation3], 4
      %s22 = int_to_ptr.vmem [resolvable:$true] %s21
      %24 = dma.hbm_to_vmem [thread:$0]  %s19, 128, %s22, [#allocation4]
    $region5: #{tpu_custom_call.1} parent=1 // pred_fallthru
      _
    // Predicated region
    $region6: #{tpu_custom_call.1} parent=1 // pred_check
      _
    $region7: #{tpu_custom_call.1} parent=1 // pred_check_branch
      %26 = sbr.rel (0) target = $region9
    $region8: #{tpu_custom_call.1} parent=1 // pred_region
      %s27 = sadd.s32 0, 0
      %p28 = scmp.lt.s32.totalorder %s27, 0
      %s29 = scalar_select %p28, %s27, 0
      %s31 = ssub.s32 128, 128
      %32 = vsyncadd [#allocation7], %s31
      %s33 = smul.addr %s29, 128
      %s34 = scalar_lea.hbm %s1, %s33
      %s36 = sshll.u32 [#allocation6], 4
      %s37 = int_to_ptr.vmem [resolvable:$true] %s36
      %39 = dma.hbm_to_vmem [thread:$0]  %s34, 128, %s37, [#allocation7]
    $region9: #{tpu_custom_call.1} parent=1 // pred_fallthru
      _
    // Predicated region
    $region10: #{tpu_custom_call.1} parent=1 // pred_check
      _
    $region11: #{tpu_custom_call.1} parent=1 // pred_check_branch
      %41 = sbr.rel (0) target = $region13
    $region12: #{tpu_custom_call.1} parent=1 // pred_region
      %42 = dma.done [#allocation4], 128
    $region13: #{tpu_custom_call.1} parent=1 // pred_fallthru
      _
    // Predicated region
    $region14: #{tpu_custom_call.1} parent=1 // pred_check
      _
    $region15: #{tpu_custom_call.1} parent=1 // pred_check_branch
      %44 = sbr.rel (0) target = $region17
    $region16: #{tpu_custom_call.1} parent=1 // pred_region
      %45 = dma.done [#allocation7], 128
    $region17: #{tpu_custom_call.1} parent=1 // pred_fallthru
      _
    %s46 = sadd.s32 0, 0
    %p47 = scmp.lt.s32.totalorder %s46, 0
    %s48 = scalar_select %p47, %s46, 0
    %s49 = sadd.s32 0, 0
    %p50 = scmp.lt.s32.totalorder %s49, 0
    %s51 = scalar_select %p50, %s49, 0
    %p52 = scmp.eq.s32.totalorder 0, 0
    // Predicated region
    $region18: #{tpu_custom_call.1} parent=1 // pred_check
      %p53 = pneg %p52
    $region19: #{tpu_custom_call.1} parent=1 // pred_check_branch
      %55 = sbr.rel (%p53) target = $region21
    $region20: #{tpu_custom_call.1} parent=1 // pred_region
      %vm56 = vcmask 7168
      %57 = vst.msk [vmem:[#allocation2] sm:$0xff] %vm56, 0.0
    $region21: #{tpu_custom_call.1} parent=1 // pred_fallthru
      _
    %v58 = vld [vmem:[#allocation3] sm:$0xff]
    %v59 = vld [vmem:[#allocation6] sm:$0xff]
    %s60 = sadd.s32 0, 0
    %s61 = smul.u32 %s60, 8
    %v62 = vlaneseq
    %v63 = vshrl.u32 %v62, 7
    %v64 = vstv %s61
    %v65 = vadd.s32 %v64, %v63
    %vm66 = vcmp.lt.s32.totalorder %v65, 8
    %vm67 = vcmask 261120
    %v68 = vsel %vm67, %v58, 0.0
    %69 = vadd.xlane.f32.xlu0 %v68
    %v70 = vpop.xlane.xlu0 %69
    %v71 = vrcp.pop 32.0
    %v72 = vmul.f32 %v70, %v71
    %v73 = vsub.f32 %v58, %v72
    %v74 = vtanh.pop %v73
    %v75 = vadd.f32 %v74, 1e-05
    %v76 = vmul.f32 %v75, 1.442695
    %v77 = vpow.pop %v76
    %v78 = vsel %vm67, %v77, 0.0
    %79 = vadd.xlane.f32.xlu0 %v78
    %v80 = vpop.xlane.xlu0 %79
    %v81 = vlog2.pop %v80
    %v82 = vmul.f32 %v81, 0.6931472
    %v83 = vsub.f32 %v82, %v75
    %v84 = vmul.f32 %v59, %v83
    %v85 = vsel %vm67, %v84, 0.0
    %86 = vadd.xlane.f32.xlu0 %v85
    %v87 = vpop.xlane.xlu0 %86
    %v88 = vld [vmem:[#allocation2] sm:$0xff]
    %v89 = vsel %vm66, %v87, 0.0
    %v90 = vadd.f32 %v88, %v89
    %vm91 = vcmask 7168
    %92 = vst.msk [vmem:[#allocation2] sm:$0xff] %vm91, %v90
    // Predicated region
    $region22: #{tpu_custom_call.1} parent=1 // pred_check
      %p93 = pneg %p52
    $region23: #{tpu_custom_call.1} parent=1 // pred_check_branch
      %95 = sbr.rel (%p93) target = $region25
    $region24: #{tpu_custom_call.1} parent=1 // pred_region
      %v96 = vld [vmem:[#allocation2] sm:$0xff]
      %v97 = vsel %vm91, %v96, 0.0
      %98 = vadd.xlane.f32.xlu0 %v97
      %v99 = vpop.xlane.xlu0 %98
      %v100 = vrot.slane %v99, 4
      %v101 = vadd.f32 %v99, %v100
      %v102 = vrot.slane %v101, 2
      %v103 = vadd.f32 %v101, %v102
      %v104 = vrot.slane %v103, 1
      %v105 = vadd.f32 %v103, %v104
      %s106 = vtos %v105
      %v107 = vlaneseq
      %v108 = vand.u32 %v107, 127
      %vm109 = vcmp.eq.s32.totalorder %v63, 0
      %vm110 = vcmp.eq.s32.totalorder %v108, 0
      %vm111 = vmand %vm109, %vm110
      %v112 = vstv %s106
      %v113 = vsel %vm111, %v112, 0.0
      %114 = vst [vmem:[#allocation8] sm:$0xff] %v113
    $region25: #{tpu_custom_call.1} parent=1 // pred_fallthru
      _
    // Predicated region
    $region26: #{tpu_custom_call.1} parent=1 // pred_check
      _
    $region27: #{tpu_custom_call.1} parent=1 // pred_check_branch
      %116 = sbr.rel (0) target = $region29
    $region28: #{tpu_custom_call.1} parent=1 // pred_region
      %s118 = ssub.s32 128, 128
      %119 = vsyncadd [#allocation5], %s118
      %s121 = sshll.u32 [#allocation8], 4
      %s122 = int_to_ptr.vmem [resolvable:$true] %s121
      %124 = dma.vmem_to_hbm [thread:$0]  %s122, 128, %s2, [#allocation5]
    $region29: #{tpu_custom_call.1} parent=1 // pred_fallthru
      _
    // Predicated region
    $region30: #{tpu_custom_call.1} parent=1 // pred_check
      _
    $region31: #{tpu_custom_call.1} parent=1 // pred_check_branch
      %126 = sbr.rel (0) target = $region33
    $region32: #{tpu_custom_call.1} parent=1 // pred_region
      %127 = dma.done [#allocation5], 128
    $region33: #{tpu_custom_call.1} parent=1 // pred_fallthru
      _
    %128 = vsyncpa [#allocation4], 1
    %129 = vsyncpa [#allocation7], 1
    %130 = vsyncpa [#allocation5], 1

</llo_original>
